<compile_context>
chip_gen: v6e
topology: v6e:2x2x1
jax: 0.10.0
libtpu: 0.0.40
codegen_flags: <defaults>
</compile_context>

<pallas_src>
import functools

import jax
import jax.numpy as jnp
from jax.experimental import pallas as pl
from jax.experimental.pallas import tpu as pltpu

NUM_NEURONS = 128


def _round_up(x, m):
    return (x + m - 1) // m * m


def _policy_kernel(x_ref, w1_ref, b1_ref, w2_ref, b2_ref, w3_ref, b3_ref, out_ref):
    # All three matmuls + activations fused per batch tile.
    # fc1/fc2: bf16 MXU inputs, f32 accumulation; elementwise math in f32.
    x = x_ref[...].astype(jnp.bfloat16)

    h1 = jnp.dot(x, w1_ref[...], preferred_element_type=jnp.float32) + b1_ref[...]
    h1 = jnp.maximum(h1, 0.0)

    h2 = jnp.dot(h1.astype(jnp.bfloat16), w2_ref[...],
                 preferred_element_type=jnp.float32) + b2_ref[...]
    h2 = jnp.maximum(h2, 0.0)

    # fc3 stays f32 (cheap 128x128 matmul) to avoid bf16 rounding of the tiny
    # U(-0.003, 0.003) weights eating into output accuracy.  w3/b3 are padded
    # to 128 output columns for a full MXU tile; only the real action_dim
    # columns are stored (narrow, contiguous HBM writeback).
    a = jnp.dot(h2, w3_ref[...], preferred_element_type=jnp.float32) + b3_ref[...]
    adim = out_ref.shape[1]
    out_ref[...] = (jnp.tanh(a[:, :adim]) * 5.0).astype(out_ref.dtype)


@functools.partial(jax.jit, static_argnames=("batch_tile",))
def policy_net_forward(state, params, batch_tile=2048):
    """Pallas forward pass of PolicyNet.

    state:  (B, state_dim) float32
    params: dict with w1 (state_dim,128), b1 (1,128), w2 (128,128), b2 (1,128),
            w3 (128,action_dim), b3 (1,action_dim)  -- all float32.
    """
    B, state_dim = state.shape
    action_dim = params["w3"].shape[1]

    # --- MXU-friendly final layer: pad w3/b3 columns to a multiple of 128.
    #     Padded columns are computed in-kernel but never written to HBM. ---
    n3 = max(NUM_NEURONS, _round_up(action_dim, NUM_NEURONS))
    w3 = jnp.zeros((NUM_NEURONS, n3), jnp.float32).at[:, :action_dim].set(
        params["w3"].astype(jnp.float32))
    b3 = jnp.zeros((1, n3), jnp.float32).at[:, :action_dim].set(
        params["b3"].astype(jnp.float32))

    # --- bf16 weight cast for fc1/fc2, done once here (not per grid step). ---
    w1 = params["w1"].astype(jnp.bfloat16)
    w2 = params["w2"].astype(jnp.bfloat16)
    b1 = params["b1"].astype(jnp.float32)
    b2 = params["b2"].astype(jnp.float32)

    # --- Batch tiling policy:
    #   * small B: single step, tile = round_up(B, 8)
    #   * large B: tile is a multiple of 256 (MXU cadence), capped both by
    #     batch_tile (VMEM budget, v7x-safe) and by ceil(B/2) rounded up so the
    #     grid keeps >= 2 parallel steps (both v7x TensorCores get work). ---
    if B <= batch_tile:
        tile = _round_up(B, 8)
    else:
        tile = min(batch_tile, _round_up(pl.cdiv(B, 2), 256))
    Bp = _round_up(B, tile)

    x = state
    if Bp != B:
        # Zero-padded rows produce tanh(b3)*5 garbage; sliced off below.
        x = jnp.zeros((Bp, state_dim), state.dtype).at[:B].set(state)

    grid = (Bp // tile,)

    # Weights/biases are replicated across the batch grid (index_map -> block 0).
    rep2d = lambda shape: pl.BlockSpec(shape, lambda i: (0, 0))

    out = pl.pallas_call(
        _policy_kernel,
        out_shape=jax.ShapeDtypeStruct((Bp, action_dim), jnp.float32),
        grid_spec=pltpu.PrefetchScalarGridSpec(
            num_scalar_prefetch=0,
            grid=grid,
            in_specs=[
                pl.BlockSpec((tile, state_dim), lambda i: (i, 0)),   # state tile
                rep2d((state_dim, NUM_NEURONS)),                     # w1 (bf16)
                rep2d((1, NUM_NEURONS)),                             # b1 (f32)
                rep2d((NUM_NEURONS, NUM_NEURONS)),                   # w2 (bf16)
                rep2d((1, NUM_NEURONS)),                             # b2 (f32)
                rep2d((NUM_NEURONS, n3)),                            # w3 (f32, padded cols)
                rep2d((1, n3)),                                      # b3 (f32, padded cols)
            ],
            # Narrow output: last block dim == full array dim (legal block),
            # contiguous HBM store of only the real action columns.
            out_specs=pl.BlockSpec((tile, action_dim), lambda i: (i, 0)),
        ),
        compiler_params=pltpu.CompilerParams(
            dimension_semantics=("parallel",),
        ),
    )(x, w1, b1, w2, b2, w3, b3)

    # Undo batch padding outside the kernel.
    return out[:B]


def init_policy_params(key, state_dim, action_dim):
    """Deterministic init mirroring the PyTorch module's __init__.

    fc1/fc2: PyTorch default U(-1/sqrt(fan_in), 1/sqrt(fan_in));
    fc3: explicitly U(-0.003, 0.003) for both weight and bias.
    Weights stored transposed, i.e. (in, out).
    """
    k1, k2, k3, k4, k5, k6 = jax.random.split(key, 6)
    lim1 = 1.0 / jnp.sqrt(jnp.float32(state_dim))
    lim2 = 1.0 / jnp.sqrt(jnp.float32(NUM_NEURONS))
    return {
        "w1": jax.random.uniform(k1, (state_dim, NUM_NEURONS), jnp.float32, -lim1, lim1),
        "b1": jax.random.uniform(k2, (1, NUM_NEURONS), jnp.float32, -lim1, lim1),
        "w2": jax.random.uniform(k3, (NUM_NEURONS, NUM_NEURONS), jnp.float32, -lim2, lim2),
        "b2": jax.random.uniform(k4, (1, NUM_NEURONS), jnp.float32, -lim2, lim2),
        "w3": jax.random.uniform(k5, (NUM_NEURONS, action_dim), jnp.float32, -0.003, 0.003),
        "b3": jax.random.uniform(k6, (1, action_dim), jnp.float32, -0.003, 0.003),
    }


def _reference_forward(state, params):
    h1 = jnp.maximum(state @ params["w1"] + params["b1"], 0.0)
    h2 = jnp.maximum(h1 @ params["w2"] + params["b2"], 0.0)
    return jnp.tanh(h2 @ params["w3"] + params["b3"]) * 5.0


if __name__ == "__main__":
    key = jax.random.PRNGKey(0)
    k_param, k_state1, k_state2 = jax.random.split(key, 3)

    STATE_DIM, ACTION_DIM = 16, 8
    params = init_policy_params(k_param, STATE_DIM, ACTION_DIM)

    # Small-shape check (single grid step, tile auto-capped to the batch).
    B_small = 8
    state_small = jax.random.normal(k_state1, (B_small, STATE_DIM), dtype=jnp.float32)
    action_small = jax.block_until_ready(policy_net_forward(state_small, params))
    expected_small = _reference_forward(state_small, params)
    assert action_small.shape == (B_small, ACTION_DIM)
    assert jnp.allclose(action_small, expected_small, atol=2e-2, rtol=2e-2), \
        "mismatch vs JAX reference (small batch)"

    # Multi-step grid + batch padding check (B not a multiple of the tile).
    B_big = 300
    state_big = jax.random.normal(k_state2, (B_big, STATE_DIM), dtype=jnp.float32)
    action_big = jax.block_until_ready(
        policy_net_forward(state_big, params, batch_tile=128))
    expected_big = _reference_forward(state_big, params)
    assert action_big.shape == (B_big, ACTION_DIM)
    assert jnp.allclose(action_big, expected_big, atol=2e-2, rtol=2e-2), \
        "mismatch vs JAX reference (padded batch)"

    print("KERNEL_OK")
</pallas_src>

<mosaic_0001>
module attributes {stable_mosaic.version = 11 : i64} {
  func.func @_policy_kernel(%arg0: i32, %arg1: memref<8x16xf32, #tpu.memory_space<vmem>>, %arg2: memref<16x128xbf16, #tpu.memory_space<vmem>>, %arg3: memref<1x128xf32, #tpu.memory_space<vmem>>, %arg4: memref<128x128xbf16, #tpu.memory_space<vmem>>, %arg5: memref<1x128xf32, #tpu.memory_space<vmem>>, %arg6: memref<128x128xf32, #tpu.memory_space<vmem>>, %arg7: memref<1x128xf32, #tpu.memory_space<vmem>>, %arg8: memref<8x8xf32, #tpu.memory_space<vmem>>) attributes {dimension_semantics = [#tpu.dimension_semantics<parallel>], iteration_bounds = array<i64: 1>, scalar_prefetch = 0 : i64, scratch_operands = 0 : i64, tpu.core_type = #tpu.core_type<tc>, window_params = [{transform_indices = @transform_0, window_bounds = array<i64: 8, 16>}, {pipeline_mode = #tpu.pipeline_mode<synchronous>, transform_indices = @transform_1, window_bounds = array<i64: 16, 128>}, {pipeline_mode = #tpu.pipeline_mode<synchronous>, transform_indices = @transform_2, window_bounds = array<i64: 1, 128>}, {pipeline_mode = #tpu.pipeline_mode<synchronous>, transform_indices = @transform_3, window_bounds = array<i64: 128, 128>}, {pipeline_mode = #tpu.pipeline_mode<synchronous>, transform_indices = @transform_4, window_bounds = array<i64: 1, 128>}, {pipeline_mode = #tpu.pipeline_mode<synchronous>, transform_indices = @transform_5, window_bounds = array<i64: 128, 128>}, {pipeline_mode = #tpu.pipeline_mode<synchronous>, transform_indices = @transform_6, window_bounds = array<i64: 1, 128>}, {transform_indices = @transform_7, window_bounds = array<i64: 8, 8>}]} {
    %c0 = arith.constant 0 : index
    %c0_0 = arith.constant 0 : index
    %0 = vector.load %arg1[%c0, %c0_0] : memref<8x16xf32, #tpu.memory_space<vmem>>, vector<8x16xf32>
    %1 = arith.truncf %0 : vector<8x16xf32> to vector<8x16xbf16>
    %c0_1 = arith.constant 0 : index
    %c0_2 = arith.constant 0 : index
    %2 = vector.load %arg2[%c0_1, %c0_2] : memref<16x128xbf16, #tpu.memory_space<vmem>>, vector<16x128xbf16>
    %cst = arith.constant dense<0.000000e+00> : vector<8x128xf32>
    %3 = tpu.matmul %1, %2, %cst {dimension_numbers = #tpu.dot_dimension_numbers<[1], [0], [0], [1], [0, 0, 1, 1], [], []>} : vector<8x16xbf16>, vector<16x128xbf16>, vector<8x128xf32> -> vector<8x128xf32>
    %c0_3 = arith.constant 0 : index
    %c0_4 = arith.constant 0 : index
    %4 = vector.load %arg3[%c0_3, %c0_4] : memref<1x128xf32, #tpu.memory_space<vmem>>, vector<1x128xf32>
    %5 = vector.broadcast %4 : vector<1x128xf32> to vector<8x128xf32>
    %6 = arith.addf %3, %5 : vector<8x128xf32>
    %cst_5 = arith.constant 0.000000e+00 : f32
    %7 = vector.broadcast %cst_5 : f32 to vector<8x128xf32>
    %8 = arith.maximumf %6, %7 : vector<8x128xf32>
    %9 = arith.truncf %8 : vector<8x128xf32> to vector<8x128xbf16>
    %c0_6 = arith.constant 0 : index
    %c0_7 = arith.constant 0 : index
    %10 = vector.load %arg4[%c0_6, %c0_7] : memref<128x128xbf16, #tpu.memory_space<vmem>>, vector<128x128xbf16>
    %cst_8 = arith.constant dense<0.000000e+00> : vector<8x128xf32>
    %11 = tpu.matmul %9, %10, %cst_8 {dimension_numbers = #tpu.dot_dimension_numbers<[1], [0], [0], [1], [0, 0, 1, 1], [], []>} : vector<8x128xbf16>, vector<128x128xbf16>, vector<8x128xf32> -> vector<8x128xf32>
    %c0_9 = arith.constant 0 : index
    %c0_10 = arith.constant 0 : index
    %12 = vector.load %arg5[%c0_9, %c0_10] : memref<1x128xf32, #tpu.memory_space<vmem>>, vector<1x128xf32>
    %13 = vector.broadcast %12 : vector<1x128xf32> to vector<8x128xf32>
    %14 = arith.addf %11, %13 : vector<8x128xf32>
    %cst_11 = arith.constant 0.000000e+00 : f32
    %15 = vector.broadcast %cst_11 : f32 to vector<8x128xf32>
    %16 = arith.maximumf %14, %15 : vector<8x128xf32>
    %c0_12 = arith.constant 0 : index
    %c0_13 = arith.constant 0 : index
    %17 = vector.load %arg6[%c0_12, %c0_13] : memref<128x128xf32, #tpu.memory_space<vmem>>, vector<128x128xf32>
    %cst_14 = arith.constant dense<0.000000e+00> : vector<8x128xf32>
    %18 = tpu.matmul %16, %17, %cst_14 {dimension_numbers = #tpu.dot_dimension_numbers<[1], [0], [0], [1], [0, 0, 1, 1], [], []>} : vector<8x128xf32>, vector<128x128xf32>, vector<8x128xf32> -> vector<8x128xf32>
    %c0_15 = arith.constant 0 : index
    %c0_16 = arith.constant 0 : index
    %19 = vector.load %arg7[%c0_15, %c0_16] : memref<1x128xf32, #tpu.memory_space<vmem>>, vector<1x128xf32>
    %20 = vector.broadcast %19 : vector<1x128xf32> to vector<8x128xf32>
    %21 = arith.addf %18, %20 : vector<8x128xf32>
    %22 = vector.extract_strided_slice %21 {offsets = [0, 0], sizes = [8, 8], strides = [1, 1]} : vector<8x128xf32> to vector<8x8xf32>
    %23 = math.tanh %22 : vector<8x8xf32>
    %cst_17 = arith.constant 5.000000e+00 : f32
    %24 = vector.broadcast %cst_17 : f32 to vector<8x8xf32>
    %25 = arith.mulf %23, %24 : vector<8x8xf32>
    %c0_18 = arith.constant 0 : index
    %c0_19 = arith.constant 0 : index
    %26 = vector.load %arg8[%c0_18, %c0_19] : memref<8x8xf32, #tpu.memory_space<vmem>>, vector<8x8xf32>
    tpu.vector_store %arg8[%c0_18, %c0_19], %25 {strides = array<i32>} : memref<8x8xf32, #tpu.memory_space<vmem>>, vector<8x8xf32>,
    return
  }
  func.func @transform_0(%arg0: i32) -> (i32, i32) {
    %c0_i32 = arith.constant 0 : i32
    %c0_i32_0 = arith.constant 0 : i32
    return %arg0, %c0_i32 : i32, i32
  }
  func.func @transform_1(%arg0: i32) -> (i32, i32) {
    %c0_i32 = arith.constant 0 : i32
    %c0_i32_0 = arith.constant 0 : i32
    %c0_i32_1 = arith.constant 0 : i32
    return %c0_i32, %c0_i32_0 : i32, i32
  }
  func.func @transform_2(%arg0: i32) -> (i32, i32) {
    %c0_i32 = arith.constant 0 : i32
    %c0_i32_0 = arith.constant 0 : i32
    %c0_i32_1 = arith.constant 0 : i32
    return %c0_i32, %c0_i32_0 : i32, i32
  }
  func.func @transform_3(%arg0: i32) -> (i32, i32) {
    %c0_i32 = arith.constant 0 : i32
    %c0_i32_0 = arith.constant 0 : i32
    %c0_i32_1 = arith.constant 0 : i32
    return %c0_i32, %c0_i32_0 : i32, i32
  }
  func.func @transform_4(%arg0: i32) -> (i32, i32) {
    %c0_i32 = arith.constant 0 : i32
    %c0_i32_0 = arith.constant 0 : i32
    %c0_i32_1 = arith.constant 0 : i32
    return %c0_i32, %c0_i32_0 : i32, i32
  }
  func.func @transform_5(%arg0: i32) -> (i32, i32) {
    %c0_i32 = arith.constant 0 : i32
    %c0_i32_0 = arith.constant 0 : i32
    %c0_i32_1 = arith.constant 0 : i32
    return %c0_i32, %c0_i32_0 : i32, i32
  }
  func.func @transform_6(%arg0: i32) -> (i32, i32) {
    %c0_i32 = arith.constant 0 : i32
    %c0_i32_0 = arith.constant 0 : i32
    %c0_i32_1 = arith.constant 0 : i32
    return %c0_i32, %c0_i32_0 : i32, i32
  }
  func.func @transform_7(%arg0: i32) -> (i32, i32) {
    %c0_i32 = arith.constant 0 : i32
    %c0_i32_0 = arith.constant 0 : i32
    return %arg0, %c0_i32 : i32, i32
  }
}

</mosaic_0001>

<llo_original>
// kernel: policy_net_forward.1
$region0: #{policy_net_forward.1}
  #allocation0 [shape = 'u32[]', space=smem, size = 0x4, offset = 0x4, fixed_abs, tag = 'smem constant byte address 0x4 - core index']
  #allocation1 [shape = 'u32[144,128]{1,0:T(1,128)}', space=vmem, size = 0x12000, scoped, tag = 'internal scratch']
  %s0 = inlined_call_operand.vmem [shape: f32[8,16], index: 0, kind: input, shape index: {}]
  %s1 = inlined_call_operand.vmem [shape: bf16[16,128], index: 1, kind: input, shape index: {}]
  %s2 = inlined_call_operand.vmem [shape: f32[1,128], index: 2, kind: input, shape index: {}]
  %s3 = inlined_call_operand.vmem [shape: bf16[128,128], index: 3, kind: input, shape index: {}]
  %s4 = inlined_call_operand.vmem [shape: f32[1,128], index: 4, kind: input, shape index: {}]
  %s5 = inlined_call_operand.vmem [shape: f32[128,128], index: 5, kind: input, shape index: {}]
  %s6 = inlined_call_operand.vmem [shape: f32[1,128], index: 6, kind: input, shape index: {}]
  %s7 = inlined_call_operand.hbm [shape: f32[8,8], index: 7, kind: output, shape index: {}]
  %s8 = sld [smem:[#allocation0]]
  $region38: #{policy_net_forward.1} parent=0
    _
  %s10 = ssub.s32 1, %s8
  %s11 = scalar_select 0, %s10, %s8
  $region1: #{policy_net_forward.1} parent=0
    #allocation2 [shape = 'u8[4096]{0}', space=vmem, size = 0x1000, scoped, tag = 'output window, operand 0, single buffered']
    #allocation3 [shape = 's32[1]{0}', space=sflag, size = 0x4, scoped, tag = 'scoped memory for policy_net_forward.1']
    %12 = vsyncpa [#allocation3], 0
    // Predicated region
    $region2: #{policy_net_forward.1} parent=1 // pred_check
      _
    $region3: #{policy_net_forward.1} parent=1 // pred_check_branch
      %14 = sbr.rel (0) target = $region5
    $region4: #{policy_net_forward.1} parent=1 // pred_region
      _
    $region5: #{policy_net_forward.1} parent=1 // pred_fallthru
      _
    // Predicated region
    $region6: #{policy_net_forward.1} parent=1 // pred_check
      _
    $region7: #{policy_net_forward.1} parent=1 // pred_check_branch
      %16 = sbr.rel (0) target = $region9
    $region8: #{policy_net_forward.1} parent=1 // pred_region
      _
    $region9: #{policy_net_forward.1} parent=1 // pred_fallthru
      _
    // Predicated region
    $region10: #{policy_net_forward.1} parent=1 // pred_check
      _
    $region11: #{policy_net_forward.1} parent=1 // pred_check_branch
      %18 = sbr.rel (0) target = $region13
    $region12: #{policy_net_forward.1} parent=1 // pred_region
      _
    $region13: #{policy_net_forward.1} parent=1 // pred_fallthru
      _
    // Predicated region
    $region14: #{policy_net_forward.1} parent=1 // pred_check
      _
    $region15: #{policy_net_forward.1} parent=1 // pred_check_branch
      %20 = sbr.rel (0) target = $region17
    $region16: #{policy_net_forward.1} parent=1 // pred_region
      _
    $region17: #{policy_net_forward.1} parent=1 // pred_fallthru
      _
    // Predicated region
    $region18: #{policy_net_forward.1} parent=1 // pred_check
      _
    $region19: #{policy_net_forward.1} parent=1 // pred_check_branch
      %22 = sbr.rel (0) target = $region21
    $region20: #{policy_net_forward.1} parent=1 // pred_region
      _
    $region21: #{policy_net_forward.1} parent=1 // pred_fallthru
      _
    // Predicated region
    $region22: #{policy_net_forward.1} parent=1 // pred_check
      _
    $region23: #{policy_net_forward.1} parent=1 // pred_check_branch
      %24 = sbr.rel (0) target = $region25
    $region24: #{policy_net_forward.1} parent=1 // pred_region
      _
    $region25: #{policy_net_forward.1} parent=1 // pred_fallthru
      _
    // Predicated region
    $region26: #{policy_net_forward.1} parent=1 // pred_check
      _
    $region27: #{policy_net_forward.1} parent=1 // pred_check_branch
      %26 = sbr.rel (0) target = $region29
    $region28: #{policy_net_forward.1} parent=1 // pred_region
      _
    $region29: #{policy_net_forward.1} parent=1 // pred_fallthru
      _
    %v28 = vld [vmem:[%s0] sm:$0xff]
    %v29 = vpack.c.bf16 %v28, %v28
    %v30 = vld [vmem:[%s1] sm:$0xf]
    %v31 = vld [vmem:[%s1 + $0x4] sm:$0xf]
    %v32 = vld [vmem:[%s2] sm:$0x1]
    %v34 = vlaneseq
    %v35 = vshrl.u32 %v34, 7
    %v36 = vsub.s32 0, %v35
    %v37 = vrot.slane %v32, %v36
    %v41 = vunpack.c.l.b16 %v30
    %v42 = vunpack.c.l.b16 %v31
    %v43 = vpack.c.b16 %v42, %v41
    %vm45 = vcmask 130048
    %v47 = vsel %vm45, %v29, 0
    %49 = vmatprep.subr.bf16.mxu0 0
    %50 = vmatpush1.bf16.msra.mxu0 0
    %51 = vmatprep.subr.bf16.mxu0 0
    %52 = vmatpush1.bf16.msra.mxu0 0
    %53 = vmatprep.subr.bf16.mxu0 0
    %54 = vmatpush1.bf16.msra.mxu0 0
    %55 = vmatprep.subr.bf16.mxu0 0
    %56 = vmatpush1.bf16.msra.mxu0 0
    %57 = vmatprep.subr.bf16.mxu0 0
    %58 = vmatpush1.bf16.msra.mxu0 0
    %59 = vmatprep.subr.bf16.mxu0 0
    %60 = vmatpush1.bf16.msra.mxu0 0
    %61 = vmatprep.subr.bf16.mxu0 0
    %62 = vmatpush1.bf16.msra.mxu0 0
    %63 = vmatprep.subr.bf16.mxu0 0
    %64 = vmatpush1.bf16.msra.mxu0 %v43
    %65 = vmatprep.subr.bf16.mxu0 0
    %66 = vmatpush2.bf16.msra.mxu0 0
    %67 = vmatprep.subr.bf16.mxu0 0
    %68 = vmatpush2.bf16.msra.mxu0 0
    %69 = vmatprep.subr.bf16.mxu0 0
    %70 = vmatpush2.bf16.msra.mxu0 0
    %71 = vmatprep.subr.bf16.mxu0 0
    %72 = vmatpush2.bf16.msra.mxu0 0
    %73 = vmatprep.subr.bf16.mxu0 0
    %74 = vmatpush2.bf16.msra.mxu0 0
    %75 = vmatprep.subr.bf16.mxu0 0
    %76 = vmatpush2.bf16.msra.mxu0 0
    %77 = vmatprep.subr.bf16.mxu0 0
    %78 = vmatpush2.bf16.msra.mxu0 0
    %79 = vmatprep.subr.bf16.mxu0 0
    %80 = vmatpush2.bf16.msra.mxu0 0
    %81 = vmatprep.mubr.bf16.mxu0 0
    %82 = vmatmul.mubr.bf16.gmra.mxu0 %v47
    %v83 = vpop.f32.mrf.mxu0
    %v84 = vadd.f32 %v37, %v83
    %v85 = vpop.f32.mrf.mxu0
    %v86 = vpop.f32.mrf.mxu0
    %v87 = vpop.f32.mrf.mxu0
    %88 = vdwg.mxu0
    %v89 = vmax.f32 %v84, 0.0
    %v90 = vpack.c.bf16 %v89, %v89
    %v91 = vld [vmem:[%s3] sm:$0xf]
    %v92 = vld [vmem:[%s3 + $0x4] sm:$0xf]
    %v93 = vld [vmem:[%s3 + $0x8] sm:$0xf]
    %v94 = vld [vmem:[%s3 + $0xc] sm:$0xf]
    %v95 = vld [vmem:[%s3 + $0x10] sm:$0xf]
    %v96 = vld [vmem:[%s3 + $0x14] sm:$0xf]
    %v97 = vld [vmem:[%s3 + $0x18] sm:$0xf]
    %v98 = vld [vmem:[%s3 + $0x1c] sm:$0xf]
    %v99 = vld [vmem:[%s3 + $0x20] sm:$0xf]
    %v100 = vld [vmem:[%s3 + $0x24] sm:$0xf]
    %v101 = vld [vmem:[%s3 + $0x28] sm:$0xf]
    %v102 = vld [vmem:[%s3 + $0x2c] sm:$0xf]
    %v103 = vld [vmem:[%s3 + $0x30] sm:$0xf]
    %v104 = vld [vmem:[%s3 + $0x34] sm:$0xf]
    %v105 = vld [vmem:[%s3 + $0x38] sm:$0xf]
    %v106 = vld [vmem:[%s3 + $0x3c] sm:$0xf]
    %v107 = vld [vmem:[%s4] sm:$0x1]
    %v109 = vlaneseq
    %v110 = vshrl.u32 %v109, 7
    %v111 = vsub.s32 0, %v110
    %v112 = vrot.slane %v107, %v111
    %v130 = vunpack.c.l.b16 %v91
    %v131 = vunpack.c.l.b16 %v92
    %v132 = vunpack.c.l.b16 %v93
    %v133 = vunpack.c.l.b16 %v94
    %v134 = vunpack.c.l.b16 %v95
    %v135 = vunpack.c.l.b16 %v96
    %v136 = vunpack.c.l.b16 %v97
    %v137 = vunpack.c.l.b16 %v98
    %v138 = vunpack.c.l.b16 %v99
    %v139 = vunpack.c.l.b16 %v100
    %v140 = vunpack.c.l.b16 %v101
    %v141 = vunpack.c.l.b16 %v102
    %v142 = vunpack.c.l.b16 %v103
    %v143 = vunpack.c.l.b16 %v104
    %v144 = vunpack.c.l.b16 %v105
    %v145 = vunpack.c.l.b16 %v106
    %v146 = vpack.c.b16 %v131, %v130
    %v147 = vpack.c.b16 %v133, %v132
    %v148 = vpack.c.b16 %v135, %v134
    %v149 = vpack.c.b16 %v137, %v136
    %v150 = vpack.c.b16 %v139, %v138
    %v151 = vpack.c.b16 %v141, %v140
    %v152 = vpack.c.b16 %v143, %v142
    %v153 = vpack.c.b16 %v145, %v144
    %162 = vmatprep.subr.bf16.mxu0 0
    %163 = vmatpush1.bf16.msra.mxu0 %v153
    %164 = vmatprep.subr.bf16.mxu0 0
    %165 = vmatpush1.bf16.msra.mxu0 %v152
    %166 = vmatprep.subr.bf16.mxu0 0
    %167 = vmatpush1.bf16.msra.mxu0 %v151
    %168 = vmatprep.subr.bf16.mxu0 0
    %169 = vmatpush1.bf16.msra.mxu0 %v150
    %170 = vmatprep.subr.bf16.mxu0 0
    %171 = vmatpush1.bf16.msra.mxu0 %v149
    %172 = vmatprep.subr.bf16.mxu0 0
    %173 = vmatpush1.bf16.msra.mxu0 %v148
    %174 = vmatprep.subr.bf16.mxu0 0
    %175 = vmatpush1.bf16.msra.mxu0 %v147
    %176 = vmatprep.subr.bf16.mxu0 0
    %177 = vmatpush1.bf16.msra.mxu0 %v146
    %178 = vmatprep.subr.bf16.mxu0 0
    %179 = vmatpush2.bf16.msra.mxu0 0
    %180 = vmatprep.subr.bf16.mxu0 0
    %181 = vmatpush2.bf16.msra.mxu0 0
    %182 = vmatprep.subr.bf16.mxu0 0
    %183 = vmatpush2.bf16.msra.mxu0 0
    %184 = vmatprep.subr.bf16.mxu0 0
    %185 = vmatpush2.bf16.msra.mxu0 0
    %186 = vmatprep.subr.bf16.mxu0 0
    %187 = vmatpush2.bf16.msra.mxu0 0
    %188 = vmatprep.subr.bf16.mxu0 0
    %189 = vmatpush2.bf16.msra.mxu0 0
    %190 = vmatprep.subr.bf16.mxu0 0
    %191 = vmatpush2.bf16.msra.mxu0 0
    %192 = vmatprep.subr.bf16.mxu0 0
    %193 = vmatpush2.bf16.msra.mxu0 0
    %194 = vmatprep.mubr.bf16.mxu0 0
    %195 = vmatmul.mubr.bf16.gmra.mxu0 %v90
    %v196 = vpop.f32.mrf.mxu0
    %v197 = vadd.f32 %v112, %v196
    %v198 = vpop.f32.mrf.mxu0
    %v199 = vpop.f32.mrf.mxu0
    %v200 = vpop.f32.mrf.mxu0
    %201 = vdwg.mxu0
    %v202 = vmax.f32 %v197, 0.0
    %v203 = vld [vmem:[%s5] sm:$0xff]
    %v204 = vld [vmem:[%s5 + $0x8] sm:$0xff]
    %v205 = vld [vmem:[%s5 + $0x10] sm:$0xff]
    %v206 = vld [vmem:[%s5 + $0x18] sm:$0xff]
    %v207 = vld [vmem:[%s5 + $0x20] sm:$0xff]
    %v208 = vld [vmem:[%s5 + $0x28] sm:$0xff]
    %v209 = vld [vmem:[%s5 + $0x30] sm:$0xff]
    %v210 = vld [vmem:[%s5 + $0x38] sm:$0xff]
    %v211 = vld [vmem:[%s5 + $0x40] sm:$0xff]
    %v212 = vld [vmem:[%s5 + $0x48] sm:$0xff]
    %v213 = vld [vmem:[%s5 + $0x50] sm:$0xff]
    %v214 = vld [vmem:[%s5 + $0x58] sm:$0xff]
    %v215 = vld [vmem:[%s5 + $0x60] sm:$0xff]
    %v216 = vld [vmem:[%s5 + $0x68] sm:$0xff]
    %v217 = vld [vmem:[%s5 + $0x70] sm:$0xff]
    %v218 = vld [vmem:[%s5 + $0x78] sm:$0xff]
    %v219 = vld [vmem:[%s6] sm:$0x1]
    %v221 = vlaneseq
    %v222 = vshrl.u32 %v221, 7
    %v223 = vsub.s32 0, %v222
    %v224 = vrot.slane %v219, %v223
    %226 = vmatprep.subr.mxu0 0.0
    %227 = vmatpush1.msra.mxu0 %v218
    %228 = vmatprep.subr.mxu0 0.0
    %229 = vmatpush1.msra.mxu0 %v217
    %230 = vmatprep.subr.mxu0 0.0
    %231 = vmatpush1.msra.mxu0 %v216
    %232 = vmatprep.subr.mxu0 0.0
    %233 = vmatpush1.msra.mxu0 %v215
    %234 = vmatprep.subr.mxu0 0.0
    %235 = vmatpush1.msra.mxu0 %v214
    %236 = vmatprep.subr.mxu0 0.0
    %237 = vmatpush1.msra.mxu0 %v213
    %238 = vmatprep.subr.mxu0 0.0
    %239 = vmatpush1.msra.mxu0 %v212
    %240 = vmatprep.subr.mxu0 0.0
    %241 = vmatpush1.msra.mxu0 %v211
    %242 = vmatprep.subr.mxu0 0.0
    %243 = vmatpush1.msra.mxu0 %v210
    %244 = vmatprep.subr.mxu0 0.0
    %245 = vmatpush1.msra.mxu0 %v209
    %246 = vmatprep.subr.mxu0 0.0
    %247 = vmatpush1.msra.mxu0 %v208
    %248 = vmatprep.subr.mxu0 0.0
    %249 = vmatpush1.msra.mxu0 %v207
    %250 = vmatprep.subr.mxu0 0.0
    %251 = vmatpush1.msra.mxu0 %v206
    %252 = vmatprep.subr.mxu0 0.0
    %253 = vmatpush1.msra.mxu0 %v205
    %254 = vmatprep.subr.mxu0 0.0
    %255 = vmatpush1.msra.mxu0 %v204
    %256 = vmatprep.subr.mxu0 0.0
    %257 = vmatpush1.msra.mxu0 %v203
    %258 = vmatprep.subr.mxu0 0.0
    %259 = vmatpush2.msra.mxu0 0.0
    %260 = vmatprep.subr.mxu0 0.0
    %261 = vmatpush2.msra.mxu0 0.0
    %262 = vmatprep.subr.mxu0 0.0
    %263 = vmatpush2.msra.mxu0 0.0
    %264 = vmatprep.subr.mxu0 0.0
    %265 = vmatpush2.msra.mxu0 0.0
    %266 = vmatprep.subr.mxu0 0.0
    %267 = vmatpush2.msra.mxu0 0.0
    %268 = vmatprep.subr.mxu0 0.0
    %269 = vmatpush2.msra.mxu0 0.0
    %270 = vmatprep.subr.mxu0 0.0
    %271 = vmatpush2.msra.mxu0 0.0
    %272 = vmatprep.subr.mxu0 0.0
    %273 = vmatpush2.msra.mxu0 0.0
    %274 = vmatprep.subr.mxu0 0.0
    %275 = vmatpush2.msra.mxu0 0.0
    %276 = vmatprep.subr.mxu0 0.0
    %277 = vmatpush2.msra.mxu0 0.0
    %278 = vmatprep.subr.mxu0 0.0
    %279 = vmatpush2.msra.mxu0 0.0
    %280 = vmatprep.subr.mxu0 0.0
    %281 = vmatpush2.msra.mxu0 0.0
    %282 = vmatprep.subr.mxu0 0.0
    %283 = vmatpush2.msra.mxu0 0.0
    %284 = vmatprep.subr.mxu0 0.0
    %285 = vmatpush2.msra.mxu0 0.0
    %286 = vmatprep.subr.mxu0 0.0
    %287 = vmatpush2.msra.mxu0 0.0
    %288 = vmatprep.subr.mxu0 0.0
    %289 = vmatpush2.msra.mxu0 0.0
    %290 = vmatprep.mubr.f32.mxu0 0.0
    %291 = vmatmul.mubr.f32.gmra.mxu0 %v202
    %v292 = vpop.f32.mrf.mxu0
    %v293 = vadd.f32 %v224, %v292
    %v294 = vpop.f32.mrf.mxu0
    %295 = vdwg.mxu0
    %v296 = vtanh.pop %v293
    %v297 = vmul.f32 %v296, 5.0
    %vm298 = vcmask 64512
    %299 = vst.msk [vmem:[#allocation2] sm:$0xff] %vm298, %v297
    // Predicated region
    $region30: #{policy_net_forward.1} parent=1 // pred_check
      _
    $region31: #{policy_net_forward.1} parent=1 // pred_check_branch
      %301 = sbr.rel (0) target = $region33
    $region32: #{policy_net_forward.1} parent=1 // pred_region
      %s303 = ssub.s32 128, 128
      %304 = vsyncadd [#allocation3], %s303
      %s306 = sshll.u32 [#allocation2], 4
      %s307 = int_to_ptr.vmem [resolvable:$true] %s306
      %309 = dma.vmem_to_hbm [thread:$0]  %s307, 128, %s7, [#allocation3]
    $region33: #{policy_net_forward.1} parent=1 // pred_fallthru
      _
    // Predicated region
    $region34: #{policy_net_forward.1} parent=1 // pred_check
      _
    $region35: #{policy_net_forward.1} parent=1 // pred_check_branch
      %311 = sbr.rel (0) target = $region37
    $region36: #{policy_net_forward.1} parent=1 // pred_region
      %312 = dma.done [#allocation3], 128
    $region37: #{policy_net_forward.1} parent=1 // pred_fallthru
      _
    %313 = vsyncpa [#allocation3], 1

</llo_original>
